<compile_context>
chip_gen: v6e
topology: v6e:2x2x1
jax: 0.10.0
libtpu: 0.0.40
codegen_flags: <defaults>
</compile_context>

<pallas_src>
import functools

import jax
import jax.numpy as jnp
from jax.experimental import pallas as pl
from jax.experimental.pallas import tpu as pltpu


def mlp_kernel(x_ref, w_ref, b_ref, o_ref):
    # x_ref: [TB, K], w_ref: [K, N], b_ref: [1, N], o_ref: [TB, N]
    x = x_ref[...].astype(jnp.float32)
    w = w_ref[...].astype(jnp.float32)
    # Accumulator starts from the bias (broadcasts [1, N] over TB rows).
    acc = jnp.broadcast_to(b_ref[...].astype(jnp.float32), o_ref.shape)
    # K is tiny (3) and static -> fully unrolled VPU broadcast-multiply-adds;
    # avoids the MXU entirely at this shape.
    for k in range(x.shape[1]):
        acc = acc + x[:, k:k + 1] * w[k:k + 1, :]
    o_ref[...] = acc.astype(o_ref.dtype)


@functools.partial(jax.jit, static_argnames=("max_rows_per_block",))
def mlp_forward(x, w1, b1, w2, b2, *, max_rows_per_block=4096):
    # Fuse the two affine layers outside the kernel:
    #   W = w1 @ w2  ([3,3]),  b = b1 @ w2 + b2  ([1,3]).
    w = jnp.dot(w1, w2, preferred_element_type=jnp.float32).astype(x.dtype)
    b = (jnp.dot(b1, w2, preferred_element_type=jnp.float32) + b2).astype(x.dtype)

    B, K = x.shape
    N = w.shape[1]

    # Row-block size: multiple of 8 (sublane granularity), capped for VMEM.
    TB = min(max_rows_per_block, ((B + 7) // 8) * 8)
    TB = max(TB, 8)
    # Pad batch so it divides evenly into TB-row blocks.
    Bp = ((B + TB - 1) // TB) * TB
    if Bp != B:
        x = jnp.pad(x, ((0, Bp - B), (0, 0)))

    out = pl.pallas_call(
        mlp_kernel,
        out_shape=jax.ShapeDtypeStruct((Bp, N), x.dtype),
        grid=(Bp // TB,),
        in_specs=[
            pl.BlockSpec((TB, K), lambda i: (i, 0)),   # x tile, pipelined over batch
            pl.BlockSpec((K, N), lambda i: (0, 0)),    # fused weight, resident
            pl.BlockSpec((1, N), lambda i: (0, 0)),    # fused bias, resident
        ],
        out_specs=pl.BlockSpec((TB, N), lambda i: (i, 0)),
        compiler_params=pltpu.CompilerParams(
            dimension_semantics=("parallel",),
        ),
    )(x, w, b)
    return out[:B]


def init_params(key):
    # Deterministic init mimicking PyTorch Linear's uniform(-1/sqrt(fan_in), +1/sqrt(fan_in)).
    k1, k2, k3, k4 = jax.random.split(key, 4)
    bound1 = 1.0 / jnp.sqrt(3.0)
    bound2 = 1.0 / jnp.sqrt(4.0)
    w1 = jax.random.uniform(k1, (3, 4), jnp.float32, -bound1, bound1)  # [in, out]
    b1 = jax.random.uniform(k2, (1, 4), jnp.float32, -bound1, bound1)
    w2 = jax.random.uniform(k3, (4, 3), jnp.float32, -bound2, bound2)  # [in, out]
    b2 = jax.random.uniform(k4, (1, 3), jnp.float32, -bound2, bound2)
    return w1, b1, w2, b2


if __name__ == "__main__":
    key = jax.random.PRNGKey(0)
    kx, kx2, kp = jax.random.split(key, 3)

    w1, b1, w2, b2 = init_params(kp)

    # Case 1: batch that is already a multiple of 8.
    batch = 8
    x = jax.random.normal(kx, (batch, 3), jnp.float32)
    out = jax.block_until_ready(mlp_forward(x, w1, b1, w2, b2))
    ref = (x @ w1 + b1) @ w2 + b2
    assert out.shape == (batch, 3), out.shape
    assert jnp.allclose(out, ref, atol=1e-5, rtol=1e-5), "mismatch vs reference (batch=8)"

    # Case 2: ragged batch exercising the padding path.
    batch2 = 13
    x2 = jax.random.normal(kx2, (batch2, 3), jnp.float32)
    out2 = jax.block_until_ready(mlp_forward(x2, w1, b1, w2, b2))
    ref2 = (x2 @ w1 + b1) @ w2 + b2
    assert out2.shape == (batch2, 3), out2.shape
    assert jnp.allclose(out2, ref2, atol=1e-5, rtol=1e-5), "mismatch vs reference (batch=13)"

    print("KERNEL_OK")
</pallas_src>

<mosaic_0001>
module attributes {stable_mosaic.version = 11 : i64} {
  func.func @mlp_kernel(%arg0: i32, %arg1: memref<8x3xf32, #tpu.memory_space<vmem>>, %arg2: memref<3x3xf32, #tpu.memory_space<vmem>>, %arg3: memref<1x3xf32, #tpu.memory_space<vmem>>, %arg4: memref<8x3xf32, #tpu.memory_space<vmem>>) attributes {dimension_semantics = [#tpu.dimension_semantics<parallel>], iteration_bounds = array<i64: 1>, scalar_prefetch = 0 : i64, scratch_operands = 0 : i64, tpu.core_type = #tpu.core_type<tc>, window_params = [{transform_indices = @transform_0, window_bounds = array<i64: 8, 3>}, {pipeline_mode = #tpu.pipeline_mode<synchronous>, transform_indices = @transform_1, window_bounds = array<i64: 3, 3>}, {pipeline_mode = #tpu.pipeline_mode<synchronous>, transform_indices = @transform_2, window_bounds = array<i64: 1, 3>}, {transform_indices = @transform_3, window_bounds = array<i64: 8, 3>}]} {
    %c0 = arith.constant 0 : index
    %c0_0 = arith.constant 0 : index
    %0 = vector.load %arg1[%c0, %c0_0] : memref<8x3xf32, #tpu.memory_space<vmem>>, vector<8x3xf32>
    %c0_1 = arith.constant 0 : index
    %c0_2 = arith.constant 0 : index
    %1 = vector.load %arg2[%c0_1, %c0_2] : memref<3x3xf32, #tpu.memory_space<vmem>>, vector<3x3xf32>
    %c0_3 = arith.constant 0 : index
    %c0_4 = arith.constant 0 : index
    %2 = vector.load %arg3[%c0_3, %c0_4] : memref<1x3xf32, #tpu.memory_space<vmem>>, vector<1x3xf32>
    %3 = vector.shape_cast %2 : vector<1x3xf32> to vector<1x3xf32>
    %4 = vector.broadcast %3 : vector<1x3xf32> to vector<8x3xf32>
    %5 = vector.extract_strided_slice %0 {offsets = [0, 0], sizes = [8, 1], strides = [1, 1]} : vector<8x3xf32> to vector<8x1xf32>
    %6 = vector.extract_strided_slice %1 {offsets = [0, 0], sizes = [1, 3], strides = [1, 1]} : vector<3x3xf32> to vector<1x3xf32>
    %7 = vector.broadcast %5 : vector<8x1xf32> to vector<8x3xf32>
    %8 = vector.broadcast %6 : vector<1x3xf32> to vector<8x3xf32>
    %9 = arith.mulf %7, %8 : vector<8x3xf32>
    %10 = arith.addf %4, %9 : vector<8x3xf32>
    %11 = vector.extract_strided_slice %0 {offsets = [0, 1], sizes = [8, 1], strides = [1, 1]} : vector<8x3xf32> to vector<8x1xf32>
    %12 = vector.extract_strided_slice %1 {offsets = [1, 0], sizes = [1, 3], strides = [1, 1]} : vector<3x3xf32> to vector<1x3xf32>
    %13 = vector.broadcast %11 : vector<8x1xf32> to vector<8x3xf32>
    %14 = vector.broadcast %12 : vector<1x3xf32> to vector<8x3xf32>
    %15 = arith.mulf %13, %14 : vector<8x3xf32>
    %16 = arith.addf %10, %15 : vector<8x3xf32>
    %17 = vector.extract_strided_slice %0 {offsets = [0, 2], sizes = [8, 1], strides = [1, 1]} : vector<8x3xf32> to vector<8x1xf32>
    %18 = vector.extract_strided_slice %1 {offsets = [2, 0], sizes = [1, 3], strides = [1, 1]} : vector<3x3xf32> to vector<1x3xf32>
    %19 = vector.broadcast %17 : vector<8x1xf32> to vector<8x3xf32>
    %20 = vector.broadcast %18 : vector<1x3xf32> to vector<8x3xf32>
    %21 = arith.mulf %19, %20 : vector<8x3xf32>
    %22 = arith.addf %16, %21 : vector<8x3xf32>
    %c0_5 = arith.constant 0 : index
    %c0_6 = arith.constant 0 : index
    %23 = vector.load %arg4[%c0_5, %c0_6] : memref<8x3xf32, #tpu.memory_space<vmem>>, vector<8x3xf32>
    tpu.vector_store %arg4[%c0_5, %c0_6], %22 {strides = array<i32>} : memref<8x3xf32, #tpu.memory_space<vmem>>, vector<8x3xf32>,
    return
  }
  func.func @transform_0(%arg0: i32) -> (i32, i32) {
    %c0_i32 = arith.constant 0 : i32
    %c0_i32_0 = arith.constant 0 : i32
    return %arg0, %c0_i32 : i32, i32
  }
  func.func @transform_1(%arg0: i32) -> (i32, i32) {
    %c0_i32 = arith.constant 0 : i32
    %c0_i32_0 = arith.constant 0 : i32
    %c0_i32_1 = arith.constant 0 : i32
    return %c0_i32, %c0_i32_0 : i32, i32
  }
  func.func @transform_2(%arg0: i32) -> (i32, i32) {
    %c0_i32 = arith.constant 0 : i32
    %c0_i32_0 = arith.constant 0 : i32
    %c0_i32_1 = arith.constant 0 : i32
    return %c0_i32, %c0_i32_0 : i32, i32
  }
  func.func @transform_3(%arg0: i32) -> (i32, i32) {
    %c0_i32 = arith.constant 0 : i32
    %c0_i32_0 = arith.constant 0 : i32
    return %arg0, %c0_i32 : i32, i32
  }
}

</mosaic_0001>

<llo_original>
// kernel: mlp_forward.1
$region0: #{mlp_forward.1}
  #allocation0 [shape = 'u32[]', space=smem, size = 0x4, offset = 0x4, fixed_abs, tag = 'smem constant byte address 0x4 - core index']
  #allocation1 [shape = 'u32[144,128]{1,0:T(1,128)}', space=vmem, size = 0x12000, scoped, tag = 'internal scratch']
  %s0 = inlined_call_operand.vmem [shape: f32[8,3], index: 0, kind: input, shape index: {}]
  %s1 = inlined_call_operand.vmem [shape: f32[3,3], index: 1, kind: input, shape index: {}]
  %s2 = inlined_call_operand.vmem [shape: f32[1,3], index: 2, kind: input, shape index: {}]
  %s3 = inlined_call_operand.vmem [shape: f32[8,3], index: 3, kind: output, shape index: {}]
  %s4 = sld [smem:[#allocation0]]
  $region22: #{mlp_forward.1} parent=0
    _
  %s6 = ssub.s32 1, %s4
  %s7 = scalar_select 0, %s6, %s4
  // Predicated region
  $region2: #{mlp_forward.1} parent=0 // pred_check
    _
  $region3: #{mlp_forward.1} parent=0 // pred_check_branch
    %9 = sbr.rel (0) target = $region5
  $region4: #{mlp_forward.1} parent=0 // pred_region
    _
  $region5: #{mlp_forward.1} parent=0 // pred_fallthru
    _
  // Predicated region
  $region6: #{mlp_forward.1} parent=0 // pred_check
    _
  $region7: #{mlp_forward.1} parent=0 // pred_check_branch
    %11 = sbr.rel (0) target = $region9
  $region8: #{mlp_forward.1} parent=0 // pred_region
    _
  $region9: #{mlp_forward.1} parent=0 // pred_fallthru
    _
  // Predicated region
  $region10: #{mlp_forward.1} parent=0 // pred_check
    _
  $region11: #{mlp_forward.1} parent=0 // pred_check_branch
    %13 = sbr.rel (0) target = $region13
  $region12: #{mlp_forward.1} parent=0 // pred_region
    _
  $region13: #{mlp_forward.1} parent=0 // pred_fallthru
    _
  %v14 = vld [vmem:[%s0] sm:$0xff]
  %v15 = vld [vmem:[%s1] sm:$0x7]
  %v16 = vld [vmem:[%s2] sm:$0x1]
  %v18 = vlaneseq
  %v19 = vshrl.u32 %v18, 7
  %v20 = vsub.s32 0, %v19
  %v21 = vrot.slane %v16, %v20
  %24 = vset.pattern.permute.xlu0 0
  %25 = vperm.xlu0 %24, %v14
  %v26 = vpop.permute.xlu0 %25
  %v28 = vlaneseq
  %v29 = vshrl.u32 %v28, 7
  %v30 = vsub.s32 0, %v29
  %v31 = vrot.slane %v15, %v30
  %v32 = vmul.f32 %v26, %v31
  %v33 = vadd.f32 %v21, %v32
  %34 = vset.pattern.permute.xlu0 1
  %35 = vperm.xlu0 %34, %v14
  %v36 = vpop.permute.xlu0 %35
  %v38 = vlaneseq
  %v39 = vshrl.u32 %v38, 7
  %v40 = vsub.s32 1, %v39
  %v41 = vrot.slane %v15, %v40
  %v42 = vmul.f32 %v36, %v41
  %v43 = vadd.f32 %v33, %v42
  %44 = vset.pattern.permute.xlu0 2
  %45 = vperm.xlu0 %44, %v14
  %v46 = vpop.permute.xlu0 %45
  %v48 = vlaneseq
  %v49 = vshrl.u32 %v48, 7
  %v50 = vsub.s32 2, %v49
  %v51 = vrot.slane %v15, %v50
  %v52 = vmul.f32 %v46, %v51
  %v53 = vadd.f32 %v43, %v52
  %vm54 = vcmask 23552
  %55 = vst.msk [vmem:[%s3] sm:$0xff] %vm54, %v53
  // Predicated region
  $region14: #{mlp_forward.1} parent=0 // pred_check
    _
  $region15: #{mlp_forward.1} parent=0 // pred_check_branch
    %57 = sbr.rel (0) target = $region17
  $region16: #{mlp_forward.1} parent=0 // pred_region
    _
  $region17: #{mlp_forward.1} parent=0 // pred_fallthru
    _
  // Predicated region
  $region18: #{mlp_forward.1} parent=0 // pred_check
    _
  $region19: #{mlp_forward.1} parent=0 // pred_check_branch
    %59 = sbr.rel (0) target = $region21
  $region20: #{mlp_forward.1} parent=0 // pred_region
    _
  $region21: #{mlp_forward.1} parent=0 // pred_fallthru
    _

</llo_original>
